<compile_context>
chip_gen: v5e
topology: v5e:2x2
jax: 0.10.0
libtpu: 0.0.40
codegen_flags: <defaults>
</compile_context>

<pallas_src>
import functools

import jax
import jax.numpy as jnp
from jax import lax
from jax.experimental import pallas as pl
from jax.experimental.pallas import tpu as pltpu


# ---------------------------------------------------------------------------
# Helpers
# ---------------------------------------------------------------------------

def _round_up(x, m):
    return ((x + m - 1) // m) * m


def _shrink(t):
    # Halve a tile size while keeping it a multiple of 8 (min 8).
    return max(8, (t // 16) * 8)


def _vmem_budget_bytes():
    """Generation-aware scoped-VMEM budget, leaving headroom below physical."""
    try:
        cap = int(pltpu.get_tpu_info().vmem_capacity_bytes)
    except Exception:
        cap = 64 * 1024 * 1024  # conservative (v7x-sized) fallback
    return min((cap * 3) // 4, 112 * 1024 * 1024)


def _ln_rows(x, g, b, eps):
    """LayerNorm of (rows, d) f32 `x` with (1, d) f32 g/b. Single-pass stats."""
    d = x.shape[-1]
    s1 = jnp.sum(x, axis=-1, keepdims=True)
    s2 = jnp.sum(x * x, axis=-1, keepdims=True)
    mean = s1 * (1.0 / d)
    var = jnp.maximum(s2 * (1.0 / d) - mean * mean, 0.0)
    return (x - mean) * lax.rsqrt(var + eps) * g + b


# ---------------------------------------------------------------------------
# Path 1: fused LayerNorm(q/k/v) + scaled-dot-product attention
# ---------------------------------------------------------------------------

def _fused_prenorm_attn_kernel(params_ref, q_ref, k_ref, v_ref, o_ref,
                               qn_sc, m_sc, l_sc, acc_sc,
                               *, eps, scale, nk, tk, need_mask):
    ki = pl.program_id(2)
    prm = params_ref[...].astype(jnp.float32)          # (6, d) : g1 b1 g2 b2 g3 b3

    @pl.when(ki == 0)
    def _():
        # Normalize the q tile once per (batch, q-tile); cache in VMEM scratch.
        # The 1/sqrt(d) score scale is folded in here (cheaper than scaling s).
        q = q_ref[0].astype(jnp.float32)
        qn_sc[...] = _ln_rows(q, prm[0:1], prm[1:2], eps) * scale
        m_sc[...] = jnp.full_like(m_sc, -jnp.inf)
        l_sc[...] = jnp.zeros_like(l_sc)
        acc_sc[...] = jnp.zeros_like(acc_sc)

    # Normalize this k / v tile right after its DMA (never goes back to HBM).
    kx = _ln_rows(k_ref[0].astype(jnp.float32), prm[2:3], prm[3:4], eps)
    vx = _ln_rows(v_ref[0].astype(jnp.float32), prm[4:5], prm[5:6], eps)

    # scores (tq, tk), f32 accumulation on the MXU.
    s = lax.dot_general(qn_sc[...], kx, (((1,), (1,)), ((), ())),
                        preferred_element_type=jnp.float32)
    if need_mask:  # static: only emitted when the key axis was padded
        col = lax.broadcasted_iota(jnp.int32, s.shape, 1) + ki * tk
        s = jnp.where(col < nk, s, -jnp.inf)

    # Online softmax.
    m_prev = m_sc[...]
    m_new = jnp.maximum(m_prev, jnp.max(s, axis=-1, keepdims=True))
    alpha = jnp.exp(m_prev - m_new)
    p = jnp.exp(s - m_new)
    l_sc[...] = alpha * l_sc[...] + jnp.sum(p, axis=-1, keepdims=True)
    acc_sc[...] = alpha * acc_sc[...] + lax.dot_general(
        p, vx, (((1,), (0,)), ((), ())), preferred_element_type=jnp.float32)
    m_sc[...] = m_new

    @pl.when(ki == pl.num_programs(2) - 1)
    def _():
        out = acc_sc[...] * pl.reciprocal(l_sc[...], approx=True)
        o_ref[0] = out.astype(o_ref.dtype)


def fused_prenorm_attention(q, k, v, params, *, eps=1e-5):
    """LayerNorm(q), LayerNorm(k), LayerNorm(v) and softmax(q k^T / sqrt(d)) v,
    all inside one Pallas kernel. `params` is the stacked (6, d) array
    [g1, b1, g2, b2, g3, b3]."""
    b, nq, d = q.shape
    nk = k.shape[1]
    assert k.shape == (b, nk, d) and v.shape == (b, nk, d)

    budget = _vmem_budget_bytes()
    itemsize = q.dtype.itemsize
    tq = min(_round_up(nq, 8), 256)
    tk = min(_round_up(nk, 8), 512)

    def est(tq_, tk_):
        io = 2 * (2 * tq_ + 2 * tk_) * d * itemsize      # dbl-buffered q, o, k, v
        scratch = (2 * tq_ * d + 2 * tq_) * 4            # qn, acc, m, l (f32)
        return io + scratch + 2 * 6 * d * 4              # + param block

    while est(tq, tk) > budget and tk > 8:
        tk = _shrink(tk)
    while est(tq, tk) > budget and tq > 8:
        tq = _shrink(tq)

    nqp = _round_up(nq, tq)
    nkp = _round_up(nk, tk)
    qp = jnp.pad(q, ((0, 0), (0, nqp - nq), (0, 0))) if nqp != nq else q
    kp = jnp.pad(k, ((0, 0), (0, nkp - nk), (0, 0))) if nkp != nk else k
    vp = jnp.pad(v, ((0, 0), (0, nkp - nk), (0, 0))) if nkp != nk else v

    out = pl.pallas_call(
        functools.partial(
            _fused_prenorm_attn_kernel, eps=eps, scale=float(d) ** -0.5,
            nk=nk, tk=tk, need_mask=(nkp != nk)),
        out_shape=jax.ShapeDtypeStruct((b, nqp, d), q.dtype),
        grid_spec=pltpu.PrefetchScalarGridSpec(
            num_scalar_prefetch=0,
            grid=(b, nqp // tq, nkp // tk),
            in_specs=[
                # One tiny constant-index param block (gamma/beta x3).
                pl.BlockSpec((6, d), lambda bi, qi, ki: (0, 0)),
                pl.BlockSpec((1, tq, d), lambda bi, qi, ki: (bi, qi, 0)),
                pl.BlockSpec((1, tk, d), lambda bi, qi, ki: (bi, ki, 0)),
                pl.BlockSpec((1, tk, d), lambda bi, qi, ki: (bi, ki, 0)),
            ],
            out_specs=pl.BlockSpec((1, tq, d), lambda bi, qi, ki: (bi, qi, 0)),
            scratch_shapes=[
                pltpu.VMEM((tq, d), jnp.float32),   # normalized (scaled) q cache
                pltpu.VMEM((tq, 1), jnp.float32),   # running max
                pltpu.VMEM((tq, 1), jnp.float32),   # running denom
                pltpu.VMEM((tq, d), jnp.float32),   # output accumulator
            ],
        ),
        compiler_params=pltpu.CompilerParams(
            dimension_semantics=("parallel", "parallel", "arbitrary"),
            vmem_limit_bytes=budget,
        ),
    )(params, qp, kp, vp)
    return out[:, :nq, :] if nqp != nq else out


# ---------------------------------------------------------------------------
# Path 2: one merged LayerNorm pallas_call for an arbitrary `fn`
# ---------------------------------------------------------------------------

def _merged_ln_kernel(params_ref, x_ref, o_ref, *, eps):
    prm = params_ref[0].astype(jnp.float32)          # (2, d): gamma, beta
    x = x_ref[0].astype(jnp.float32)                 # (tm, d)
    o_ref[0] = _ln_rows(x, prm[0:1], prm[1:2], eps).astype(o_ref.dtype)


def pallas_layernorm_many(xs, gammas, betas, *, eps=1e-5):
    """LayerNorm over the last axis of every array in `xs` (all sharing the
    same feature dim and dtype) with a SINGLE pallas_call (one launch)."""
    n = len(xs)
    d = xs[0].shape[-1]
    dtype = xs[0].dtype
    rows = [x.reshape(-1, d).shape[0] for x in xs]
    rmax = max(rows)

    budget = _vmem_budget_bytes()
    itemsize = jnp.dtype(dtype).itemsize
    tm = min(_round_up(rmax, 8), 1024)
    while (2 * 2 * tm * d * itemsize + 3 * tm * d * 4) > budget and tm > 8:
        tm = _shrink(tm)

    rp = _round_up(rmax, tm)
    xp = jnp.stack([jnp.pad(x.reshape(-1, d).astype(dtype), ((0, rp - r), (0, 0)))
                    for x, r in zip(xs, rows)])                   # (n, rp, d)
    params = jnp.stack([jnp.stack([g.astype(jnp.float32), b.astype(jnp.float32)])
                        for g, b in zip(gammas, betas)])          # (n, 2, d)

    out = pl.pallas_call(
        functools.partial(_merged_ln_kernel, eps=eps),
        out_shape=jax.ShapeDtypeStruct((n, rp, d), dtype),
        grid_spec=pltpu.PrefetchScalarGridSpec(
            num_scalar_prefetch=0,
            grid=(n, rp // tm),
            in_specs=[
                pl.BlockSpec((1, 2, d), lambda t, i: (t, 0, 0)),
                pl.BlockSpec((1, tm, d), lambda t, i: (t, i, 0)),
            ],
            out_specs=pl.BlockSpec((1, tm, d), lambda t, i: (t, i, 0)),
        ),
        compiler_params=pltpu.CompilerParams(
            dimension_semantics=("parallel", "parallel"),
            vmem_limit_bytes=budget,
        ),
    )(params, xp)
    return [out[i, :r].reshape(x.shape) for i, (x, r) in enumerate(zip(xs, rows))]


# ---------------------------------------------------------------------------
# Example `fn` + PreNorm2 module
# ---------------------------------------------------------------------------

def scaled_dot_product_attention(q, k, v):
    """Example `fn`: cross attention (plain-JAX implementation).
    When PreNorm2 is constructed with this exact function, the LayerNorms are
    fused into a single Pallas flash-attention kernel instead."""
    d = q.shape[-1]
    s = jnp.einsum("bqd,bkd->bqk", q, k,
                   preferred_element_type=jnp.float32) * (float(d) ** -0.5)
    p = jax.nn.softmax(s, axis=-1)
    return jnp.einsum("bqk,bkd->bqd", p.astype(jnp.float32), v,
                      preferred_element_type=jnp.float32).astype(q.dtype)


class PreNorm2:
    """JAX/Pallas port of PreNorm2: LayerNorm each of (x, x2, x3), then fn."""

    def __init__(self, q_dim, k_dim, v_dim, fn=scaled_dot_product_attention,
                 eps=1e-5):
        # nn.LayerNorm default init: weight=1, bias=0 (deterministic).
        self.g1 = jnp.ones((q_dim,), jnp.float32)
        self.b1 = jnp.zeros((q_dim,), jnp.float32)
        self.g2 = jnp.ones((k_dim,), jnp.float32)
        self.b2 = jnp.zeros((k_dim,), jnp.float32)
        self.g3 = jnp.ones((v_dim,), jnp.float32)
        self.b3 = jnp.zeros((v_dim,), jnp.float32)
        self.fn = fn
        self.eps = eps

    def _params6(self):
        return jnp.stack([self.g1, self.b1, self.g2, self.b2,
                          self.g3, self.b3]).astype(jnp.float32)

    def __call__(self, x, x2, x3, **kwargs):
        same_dim = x.shape[-1] == x2.shape[-1] == x3.shape[-1]
        same_dtype = x.dtype == x2.dtype == x3.dtype
        if (self.fn is scaled_dot_product_attention and not kwargs and same_dim
                and same_dtype and x.ndim == 3 and x2.ndim == 3 and x3.ndim == 3
                and x2.shape == x3.shape and x.shape[0] == x2.shape[0]):
            # Fully fused: normalized q/k/v never round-trip through HBM.
            return fused_prenorm_attention(x, x2, x3, self._params6(),
                                           eps=self.eps)
        # Generic fn: one merged LayerNorm launch, then user fn in plain JAX.
        if same_dim and same_dtype:
            n1, n2, n3 = pallas_layernorm_many(
                [x, x2, x3], [self.g1, self.g2, self.g3],
                [self.b1, self.b2, self.b3], eps=self.eps)
        else:
            (n1,) = pallas_layernorm_many([x], [self.g1], [self.b1], eps=self.eps)
            (n2,) = pallas_layernorm_many([x2], [self.g2], [self.b2], eps=self.eps)
            (n3,) = pallas_layernorm_many([x3], [self.g3], [self.b3], eps=self.eps)
        return self.fn(n1, n2, n3, **kwargs)


# ---------------------------------------------------------------------------
# Self-test
# ---------------------------------------------------------------------------

if __name__ == "__main__":
    key = jax.random.PRNGKey(0)
    ks = jax.random.split(key, 12)

    B, NQ, NK, D = 2, 8, 16, 32
    x = jax.random.normal(ks[0], (B, NQ, D), jnp.float32)    # queries
    x2 = jax.random.normal(ks[1], (B, NK, D), jnp.float32)   # keys
    x3 = jax.random.normal(ks[2], (B, NK, D), jnp.float32)   # values

    # Non-default affine params so gamma/beta paths are exercised.
    g1 = 1.0 + 0.1 * jax.random.normal(ks[3], (D,), jnp.float32)
    b1 = 0.1 * jax.random.normal(ks[4], (D,), jnp.float32)
    g2 = 1.0 + 0.1 * jax.random.normal(ks[5], (D,), jnp.float32)
    b2 = 0.1 * jax.random.normal(ks[6], (D,), jnp.float32)
    g3 = 1.0 + 0.1 * jax.random.normal(ks[7], (D,), jnp.float32)
    b3 = 0.1 * jax.random.normal(ks[8], (D,), jnp.float32)

    def ref_ln(a, g, b, eps=1e-5):
        m = jnp.mean(a, axis=-1, keepdims=True)
        v = jnp.mean((a - m) ** 2, axis=-1, keepdims=True)
        return (a - m) * lax.rsqrt(v + eps) * g + b

    def ref_attn(q, k, v):
        d = q.shape[-1]
        s = jnp.einsum("bqd,bkd->bqk", q, k) / jnp.sqrt(jnp.float32(d))
        p = jax.nn.softmax(s, axis=-1)
        return jnp.einsum("bqk,bkd->bqd", p, v)

    # --- Path 1: fused norms + attention -----------------------------------
    mod = PreNorm2(D, D, D, fn=scaled_dot_product_attention)
    mod.g1, mod.b1, mod.g2, mod.b2, mod.g3, mod.b3 = g1, b1, g2, b2, g3, b3
    out = mod(x, x2, x3)
    jax.block_until_ready(out)
    ref = ref_attn(ref_ln(x, g1, b1), ref_ln(x2, g2, b2), ref_ln(x3, g3, b3))
    assert out.shape == (B, NQ, D)
    assert jnp.max(jnp.abs(out - ref)) < 5e-3

    # --- Path 1b: ragged shapes (exercises padding + key masking) ----------
    xq = jax.random.normal(ks[9], (1, 5, D), jnp.float32)
    xk = jax.random.normal(ks[10], (1, 13, D), jnp.float32)
    xv = jax.random.normal(ks[11], (1, 13, D), jnp.float32)
    out_r = mod(xq, xk, xv)
    jax.block_until_ready(out_r)
    ref_r = ref_attn(ref_ln(xq, g1, b1), ref_ln(xk, g2, b2), ref_ln(xv, g3, b3))
    assert out_r.shape == (1, 5, D)
    assert jnp.max(jnp.abs(out_r - ref_r)) < 5e-3

    # --- Path 2: arbitrary fn -> single merged LayerNorm pallas_call -------
    mod2 = PreNorm2(D, D, D, fn=lambda a, b, c: (a, b, c))
    mod2.g1, mod2.b1, mod2.g2, mod2.b2, mod2.g3, mod2.b3 = g1, b1, g2, b2, g3, b3
    n1, n2, n3 = mod2(x, x2, x3)
    jax.block_until_ready(n3)
    assert jnp.max(jnp.abs(n1 - ref_ln(x, g1, b1))) < 1e-3
    assert jnp.max(jnp.abs(n2 - ref_ln(x2, g2, b2))) < 1e-3
    assert jnp.max(jnp.abs(n3 - ref_ln(x3, g3, b3))) < 1e-3

    print("KERNEL_OK")
</pallas_src>

<mosaic_0001>
module attributes {stable_mosaic.version = 11 : i64} {
  func.func @_fused_prenorm_attn_kernel(%arg0: i32, %arg1: i32, %arg2: i32, %arg3: memref<6x32xf32, #tpu.memory_space<vmem>>, %arg4: memref<1x8x32xf32, #tpu.memory_space<vmem>>, %arg5: memref<1x16x32xf32, #tpu.memory_space<vmem>>, %arg6: memref<1x16x32xf32, #tpu.memory_space<vmem>>, %arg7: memref<1x8x32xf32, #tpu.memory_space<vmem>>, %arg8: memref<8x32xf32, #tpu.memory_space<vmem>>, %arg9: memref<8x1xf32, #tpu.memory_space<vmem>>, %arg10: memref<8x1xf32, #tpu.memory_space<vmem>>, %arg11: memref<8x32xf32, #tpu.memory_space<vmem>>) attributes {dimension_semantics = [#tpu.dimension_semantics<parallel>, #tpu.dimension_semantics<parallel>, #tpu.dimension_semantics<arbitrary>], iteration_bounds = array<i64: 2, 1, 1>, scalar_prefetch = 0 : i64, scratch_operands = 4 : i64, tpu.core_type = #tpu.core_type<tc>, window_params = [{pipeline_mode = #tpu.pipeline_mode<synchronous>, transform_indices = @transform_0, window_bounds = array<i64: 6, 32>}, {transform_indices = @transform_1, window_bounds = array<i64: 1, 8, 32>}, {transform_indices = @transform_2, window_bounds = array<i64: 1, 16, 32>}, {transform_indices = @transform_3, window_bounds = array<i64: 1, 16, 32>}, {transform_indices = @transform_4, window_bounds = array<i64: 1, 8, 32>}]} {
    %c0 = arith.constant 0 : index
    %c0_0 = arith.constant 0 : index
    %0 = vector.load %arg3[%c0, %c0_0] : memref<6x32xf32, #tpu.memory_space<vmem>>, vector<6x32xf32>
    %c0_i32 = arith.constant 0 : i32
    %1 = arith.cmpi eq, %arg2, %c0_i32 : i32
    %2 = arith.extui %1 : i1 to i32
    %c0_i32_1 = arith.constant 0 : i32
    %3 = arith.cmpi ne, %2, %c0_i32_1 : i32
    scf.if %3 {
      %c0_39 = arith.constant 0 : index
      %c0_40 = arith.constant 0 : index
      %c0_41 = arith.constant 0 : index
      %87 = vector.load %arg4[%c0_39, %c0_40, %c0_41] : memref<1x8x32xf32, #tpu.memory_space<vmem>>, vector<1x8x32xf32>
      %88 = vector.shape_cast %87 : vector<1x8x32xf32> to vector<8x32xf32>
      %89 = vector.extract_strided_slice %0 {offsets = [0, 0], sizes = [1, 32], strides = [1, 1]} : vector<6x32xf32> to vector<1x32xf32>
      %90 = vector.extract_strided_slice %0 {offsets = [1, 0], sizes = [1, 32], strides = [1, 1]} : vector<6x32xf32> to vector<1x32xf32>
      %cst_42 = arith.constant dense<0.000000e+00> : vector<8xf32>
      %91 = vector.multi_reduction <add>, %88, %cst_42 [1] : vector<8x32xf32> to vector<8xf32>
      %92 = vector.shape_cast %91 : vector<8xf32> to vector<8x1xf32>
      %93 = arith.mulf %88, %88 : vector<8x32xf32>
      %cst_43 = arith.constant dense<0.000000e+00> : vector<8xf32>
      %94 = vector.multi_reduction <add>, %93, %cst_43 [1] : vector<8x32xf32> to vector<8xf32>
      %95 = vector.shape_cast %94 : vector<8xf32> to vector<8x1xf32>
      %cst_44 = arith.constant 3.125000e-02 : f32
      %96 = vector.broadcast %cst_44 : f32 to vector<8x1xf32>
      %97 = arith.mulf %92, %96 : vector<8x1xf32>
      %cst_45 = arith.constant 3.125000e-02 : f32
      %98 = vector.broadcast %cst_45 : f32 to vector<8x1xf32>
      %99 = arith.mulf %95, %98 : vector<8x1xf32>
      %100 = arith.mulf %97, %97 : vector<8x1xf32>
      %101 = arith.subf %99, %100 : vector<8x1xf32>
      %cst_46 = arith.constant 0.000000e+00 : f32
      %102 = vector.broadcast %cst_46 : f32 to vector<8x1xf32>
      %103 = arith.maximumf %101, %102 : vector<8x1xf32>
      %104 = vector.broadcast %97 : vector<8x1xf32> to vector<8x32xf32>
      %105 = arith.subf %88, %104 : vector<8x32xf32>
      %cst_47 = arith.constant 9.99999974E-6 : f32
      %106 = vector.broadcast %cst_47 : f32 to vector<8x1xf32>
      %107 = arith.addf %103, %106 : vector<8x1xf32>
      %108 = math.rsqrt %107 : vector<8x1xf32>
      %109 = vector.broadcast %108 : vector<8x1xf32> to vector<8x32xf32>
      %110 = arith.mulf %105, %109 : vector<8x32xf32>
      %111 = vector.broadcast %89 : vector<1x32xf32> to vector<8x32xf32>
      %112 = arith.mulf %110, %111 : vector<8x32xf32>
      %113 = vector.broadcast %90 : vector<1x32xf32> to vector<8x32xf32>
      %114 = arith.addf %112, %113 : vector<8x32xf32>
      %cst_48 = arith.constant 0.176776692 : f32
      %115 = vector.broadcast %cst_48 : f32 to vector<8x32xf32>
      %116 = arith.mulf %114, %115 : vector<8x32xf32>
      %c0_49 = arith.constant 0 : index
      %c0_50 = arith.constant 0 : index
      %117 = vector.load %arg8[%c0_49, %c0_50] : memref<8x32xf32, #tpu.memory_space<vmem>>, vector<8x32xf32>
      tpu.vector_store %arg8[%c0_49, %c0_50], %116 {strides = array<i32>} : memref<8x32xf32, #tpu.memory_space<vmem>>, vector<8x32xf32>,
      %cst_51 = arith.constant 0xFF800000 : f32
      %118 = vector.broadcast %cst_51 : f32 to vector<8x1xf32>
      %c0_52 = arith.constant 0 : index
      %c0_53 = arith.constant 0 : index
      %119 = vector.load %arg9[%c0_52, %c0_53] : memref<8x1xf32, #tpu.memory_space<vmem>>, vector<8x1xf32>
      tpu.vector_store %arg9[%c0_52, %c0_53], %118 {strides = array<i32>} : memref<8x1xf32, #tpu.memory_space<vmem>>, vector<8x1xf32>,
      %cst_54 = arith.constant 0.000000e+00 : f32
      %120 = vector.broadcast %cst_54 : f32 to vector<8x1xf32>
      %c0_55 = arith.constant 0 : index
      %c0_56 = arith.constant 0 : index
      %121 = vector.load %arg10[%c0_55, %c0_56] : memref<8x1xf32, #tpu.memory_space<vmem>>, vector<8x1xf32>
      tpu.vector_store %arg10[%c0_55, %c0_56], %120 {strides = array<i32>} : memref<8x1xf32, #tpu.memory_space<vmem>>, vector<8x1xf32>,
      %cst_57 = arith.constant 0.000000e+00 : f32
      %122 = vector.broadcast %cst_57 : f32 to vector<8x32xf32>
      %c0_58 = arith.constant 0 : index
      %c0_59 = arith.constant 0 : index
      %123 = vector.load %arg11[%c0_58, %c0_59] : memref<8x32xf32, #tpu.memory_space<vmem>>, vector<8x32xf32>
      tpu.vector_store %arg11[%c0_58, %c0_59], %122 {strides = array<i32>} : memref<8x32xf32, #tpu.memory_space<vmem>>, vector<8x32xf32>,
    } else {
    }
    %c0_2 = arith.constant 0 : index
    %c0_3 = arith.constant 0 : index
    %c0_4 = arith.constant 0 : index
    %4 = vector.load %arg5[%c0_2, %c0_3, %c0_4] : memref<1x16x32xf32, #tpu.memory_space<vmem>>, vector<1x16x32xf32>
    %5 = vector.shape_cast %4 : vector<1x16x32xf32> to vector<16x32xf32>
    %6 = vector.extract_strided_slice %0 {offsets = [2, 0], sizes = [1, 32], strides = [1, 1]} : vector<6x32xf32> to vector<1x32xf32>
    %7 = vector.extract_strided_slice %0 {offsets = [3, 0], sizes = [1, 32], strides = [1, 1]} : vector<6x32xf32> to vector<1x32xf32>
    %cst = arith.constant dense<0.000000e+00> : vector<16xf32>
    %8 = vector.multi_reduction <add>, %5, %cst [1] : vector<16x32xf32> to vector<16xf32>
    %9 = vector.shape_cast %8 : vector<16xf32> to vector<16x1xf32>
    %10 = arith.mulf %5, %5 : vector<16x32xf32>
    %cst_5 = arith.constant dense<0.000000e+00> : vector<16xf32>
    %11 = vector.multi_reduction <add>, %10, %cst_5 [1] : vector<16x32xf32> to vector<16xf32>
    %12 = vector.shape_cast %11 : vector<16xf32> to vector<16x1xf32>
    %cst_6 = arith.constant 3.125000e-02 : f32
    %13 = vector.broadcast %cst_6 : f32 to vector<16x1xf32>
    %14 = arith.mulf %9, %13 : vector<16x1xf32>
    %cst_7 = arith.constant 3.125000e-02 : f32
    %15 = vector.broadcast %cst_7 : f32 to vector<16x1xf32>
    %16 = arith.mulf %12, %15 : vector<16x1xf32>
    %17 = arith.mulf %14, %14 : vector<16x1xf32>
    %18 = arith.subf %16, %17 : vector<16x1xf32>
    %cst_8 = arith.constant 0.000000e+00 : f32
    %19 = vector.broadcast %cst_8 : f32 to vector<16x1xf32>
    %20 = arith.maximumf %18, %19 : vector<16x1xf32>
    %21 = vector.broadcast %14 : vector<16x1xf32> to vector<16x32xf32>
    %22 = arith.subf %5, %21 : vector<16x32xf32>
    %cst_9 = arith.constant 9.99999974E-6 : f32
    %23 = vector.broadcast %cst_9 : f32 to vector<16x1xf32>
    %24 = arith.addf %20, %23 : vector<16x1xf32>
    %25 = math.rsqrt %24 : vector<16x1xf32>
    %26 = vector.broadcast %25 : vector<16x1xf32> to vector<16x32xf32>
    %27 = arith.mulf %22, %26 : vector<16x32xf32>
    %28 = vector.broadcast %6 : vector<1x32xf32> to vector<16x32xf32>
    %29 = arith.mulf %27, %28 : vector<16x32xf32>
    %30 = vector.broadcast %7 : vector<1x32xf32> to vector<16x32xf32>
    %31 = arith.addf %29, %30 : vector<16x32xf32>
    %c0_10 = arith.constant 0 : index
    %c0_11 = arith.constant 0 : index
    %c0_12 = arith.constant 0 : index
    %32 = vector.load %arg6[%c0_10, %c0_11, %c0_12] : memref<1x16x32xf32, #tpu.memory_space<vmem>>, vector<1x16x32xf32>
    %33 = vector.shape_cast %32 : vector<1x16x32xf32> to vector<16x32xf32>
    %34 = vector.extract_strided_slice %0 {offsets = [4, 0], sizes = [1, 32], strides = [1, 1]} : vector<6x32xf32> to vector<1x32xf32>
    %35 = vector.extract_strided_slice %0 {offsets = [5, 0], sizes = [1, 32], strides = [1, 1]} : vector<6x32xf32> to vector<1x32xf32>
    %cst_13 = arith.constant dense<0.000000e+00> : vector<16xf32>
    %36 = vector.multi_reduction <add>, %33, %cst_13 [1] : vector<16x32xf32> to vector<16xf32>
    %37 = vector.shape_cast %36 : vector<16xf32> to vector<16x1xf32>
    %38 = arith.mulf %33, %33 : vector<16x32xf32>
    %cst_14 = arith.constant dense<0.000000e+00> : vector<16xf32>
    %39 = vector.multi_reduction <add>, %38, %cst_14 [1] : vector<16x32xf32> to vector<16xf32>
    %40 = vector.shape_cast %39 : vector<16xf32> to vector<16x1xf32>
    %cst_15 = arith.constant 3.125000e-02 : f32
    %41 = vector.broadcast %cst_15 : f32 to vector<16x1xf32>
    %42 = arith.mulf %37, %41 : vector<16x1xf32>
    %cst_16 = arith.constant 3.125000e-02 : f32
    %43 = vector.broadcast %cst_16 : f32 to vector<16x1xf32>
    %44 = arith.mulf %40, %43 : vector<16x1xf32>
    %45 = arith.mulf %42, %42 : vector<16x1xf32>
    %46 = arith.subf %44, %45 : vector<16x1xf32>
    %cst_17 = arith.constant 0.000000e+00 : f32
    %47 = vector.broadcast %cst_17 : f32 to vector<16x1xf32>
    %48 = arith.maximumf %46, %47 : vector<16x1xf32>
    %49 = vector.broadcast %42 : vector<16x1xf32> to vector<16x32xf32>
    %50 = arith.subf %33, %49 : vector<16x32xf32>
    %cst_18 = arith.constant 9.99999974E-6 : f32
    %51 = vector.broadcast %cst_18 : f32 to vector<16x1xf32>
    %52 = arith.addf %48, %51 : vector<16x1xf32>
    %53 = math.rsqrt %52 : vector<16x1xf32>
    %54 = vector.broadcast %53 : vector<16x1xf32> to vector<16x32xf32>
    %55 = arith.mulf %50, %54 : vector<16x32xf32>
    %56 = vector.broadcast %34 : vector<1x32xf32> to vector<16x32xf32>
    %57 = arith.mulf %55, %56 : vector<16x32xf32>
    %58 = vector.broadcast %35 : vector<1x32xf32> to vector<16x32xf32>
    %59 = arith.addf %57, %58 : vector<16x32xf32>
    %c0_19 = arith.constant 0 : index
    %c0_20 = arith.constant 0 : index
    %60 = vector.load %arg8[%c0_19, %c0_20] : memref<8x32xf32, #tpu.memory_space<vmem>>, vector<8x32xf32>
    %cst_21 = arith.constant dense<0.000000e+00> : vector<8x16xf32>
    %61 = tpu.matmul %60, %31, %cst_21 {dimension_numbers = #tpu.dot_dimension_numbers<[1], [1], [0], [0], [0, 0, 1, 0], [], []>} : vector<8x32xf32>, vector<16x32xf32>, vector<8x16xf32> -> vector<8x16xf32>
    %c0_22 = arith.constant 0 : index
    %c0_23 = arith.constant 0 : index
    %62 = vector.load %arg9[%c0_22, %c0_23] : memref<8x1xf32, #tpu.memory_space<vmem>>, vector<8x1xf32>
    %cst_24 = arith.constant dense<0xFF800000> : vector<8xf32>
    %63 = vector.multi_reduction <maximumf>, %61, %cst_24 [1] : vector<8x16xf32> to vector<8xf32>
    %64 = vector.shape_cast %63 : vector<8xf32> to vector<8x1xf32>
    %65 = arith.maximumf %62, %64 : vector<8x1xf32>
    %66 = arith.subf %62, %65 : vector<8x1xf32>
    %67 = math.exp %66 : vector<8x1xf32>
    %68 = vector.broadcast %65 : vector<8x1xf32> to vector<8x16xf32>
    %69 = arith.subf %61, %68 : vector<8x16xf32>
    %70 = math.exp %69 : vector<8x16xf32>
    %c0_25 = arith.constant 0 : index
    %c0_26 = arith.constant 0 : index
    %71 = vector.load %arg10[%c0_25, %c0_26] : memref<8x1xf32, #tpu.memory_space<vmem>>, vector<8x1xf32>
    %72 = arith.mulf %67, %71 : vector<8x1xf32>
    %cst_27 = arith.constant dense<0.000000e+00> : vector<8xf32>
    %73 = vector.multi_reduction <add>, %70, %cst_27 [1] : vector<8x16xf32> to vector<8xf32>
    %74 = vector.shape_cast %73 : vector<8xf32> to vector<8x1xf32>
    %75 = arith.addf %72, %74 : vector<8x1xf32>
    %c0_28 = arith.constant 0 : index
    %c0_29 = arith.constant 0 : index
    %76 = vector.load %arg10[%c0_28, %c0_29] : memref<8x1xf32, #tpu.memory_space<vmem>>, vector<8x1xf32>
    tpu.vector_store %arg10[%c0_28, %c0_29], %75 {strides = array<i32>} : memref<8x1xf32, #tpu.memory_space<vmem>>, vector<8x1xf32>,
    %c0_30 = arith.constant 0 : index
    %c0_31 = arith.constant 0 : index
    %77 = vector.load %arg11[%c0_30, %c0_31] : memref<8x32xf32, #tpu.memory_space<vmem>>, vector<8x32xf32>
    %78 = vector.broadcast %67 : vector<8x1xf32> to vector<8x32xf32>
    %79 = arith.mulf %78, %77 : vector<8x32xf32>
    %cst_32 = arith.constant dense<0.000000e+00> : vector<8x32xf32>
    %80 = tpu.matmul %70, %59, %cst_32 {dimension_numbers = #tpu.dot_dimension_numbers<[1], [0], [0], [1], [0, 0, 1, 1], [], []>} : vector<8x16xf32>, vector<16x32xf32>, vector<8x32xf32> -> vector<8x32xf32>
    %81 = arith.addf %79, %80 : vector<8x32xf32>
    %c0_33 = arith.constant 0 : index
    %c0_34 = arith.constant 0 : index
    %82 = vector.load %arg11[%c0_33, %c0_34] : memref<8x32xf32, #tpu.memory_space<vmem>>, vector<8x32xf32>
    tpu.vector_store %arg11[%c0_33, %c0_34], %81 {strides = array<i32>} : memref<8x32xf32, #tpu.memory_space<vmem>>, vector<8x32xf32>,
    %c0_35 = arith.constant 0 : index
    %c0_36 = arith.constant 0 : index
    %83 = vector.load %arg9[%c0_35, %c0_36] : memref<8x1xf32, #tpu.memory_space<vmem>>, vector<8x1xf32>
    tpu.vector_store %arg9[%c0_35, %c0_36], %65 {strides = array<i32>} : memref<8x1xf32, #tpu.memory_space<vmem>>, vector<8x1xf32>,
    %c0_i32_37 = arith.constant 0 : i32
    %84 = arith.cmpi eq, %arg2, %c0_i32_37 : i32
    %85 = arith.extui %84 : i1 to i32
    %c0_i32_38 = arith.constant 0 : i32
    %86 = arith.cmpi ne, %85, %c0_i32_38 : i32
    scf.if %86 {
      %c0_39 = arith.constant 0 : index
      %c0_40 = arith.constant 0 : index
      %87 = vector.load %arg11[%c0_39, %c0_40] : memref<8x32xf32, #tpu.memory_space<vmem>>, vector<8x32xf32>
      %c0_41 = arith.constant 0 : index
      %c0_42 = arith.constant 0 : index
      %88 = vector.load %arg10[%c0_41, %c0_42] : memref<8x1xf32, #tpu.memory_space<vmem>>, vector<8x1xf32>
      %89 = tpu.reciprocal %88 {approx = true} : vector<8x1xf32> -> vector<8x1xf32>
      %90 = vector.broadcast %89 : vector<8x1xf32> to vector<8x32xf32>
      %91 = arith.mulf %87, %90 : vector<8x32xf32>
      %c0_43 = arith.constant 0 : index
      %c0_44 = arith.constant 0 : index
      %c0_45 = arith.constant 0 : index
      %92 = vector.load %arg7[%c0_43, %c0_44, %c0_45] : memref<1x8x32xf32, #tpu.memory_space<vmem>>, vector<1x8x32xf32>
      %93 = vector.shape_cast %92 : vector<1x8x32xf32> to vector<8x32xf32>
      %94 = vector.shape_cast %91 : vector<8x32xf32> to vector<1x8x32xf32>
      tpu.vector_store %arg7[%c0_43, %c0_44, %c0_45], %94 {strides = array<i32>} : memref<1x8x32xf32, #tpu.memory_space<vmem>>, vector<1x8x32xf32>,
    } else {
    }
    return
  }
  func.func @transform_0(%arg0: i32, %arg1: i32, %arg2: i32) -> (i32, i32) {
    %c0_i32 = arith.constant 0 : i32
    %c0_i32_0 = arith.constant 0 : i32
    %c0_i32_1 = arith.constant 0 : i32
    return %c0_i32, %c0_i32_0 : i32, i32
  }
  func.func @transform_1(%arg0: i32, %arg1: i32, %arg2: i32) -> (i32, i32, i32) {
    %c0_i32 = arith.constant 0 : i32
    %c0_i32_0 = arith.constant 0 : i32
    return %arg0, %arg1, %c0_i32 : i32, i32, i32
  }
  func.func @transform_2(%arg0: i32, %arg1: i32, %arg2: i32) -> (i32, i32, i32) {
    %c0_i32 = arith.constant 0 : i32
    %c0_i32_0 = arith.constant 0 : i32
    return %arg0, %arg2, %c0_i32 : i32, i32, i32
  }
  func.func @transform_3(%arg0: i32, %arg1: i32, %arg2: i32) -> (i32, i32, i32) {
    %c0_i32 = arith.constant 0 : i32
    %c0_i32_0 = arith.constant 0 : i32
    return %arg0, %arg2, %c0_i32 : i32, i32, i32
  }
  func.func @transform_4(%arg0: i32, %arg1: i32, %arg2: i32) -> (i32, i32, i32) {
    %c0_i32 = arith.constant 0 : i32
    %c0_i32_0 = arith.constant 0 : i32
    return %arg0, %arg1, %c0_i32 : i32, i32, i32
  }
}

</mosaic_0001>

<llo_original>
// kernel: tpu_custom_call.1
$region0: #{tpu_custom_call.1}
  #allocation0 [shape = 'u32[]', space=smem, size = 0x4, offset = 0x4, fixed_abs, tag = 'smem constant byte address 0x4 - core index']
  #allocation1 [shape = 'u32[72,128]{1,0:T(1,128)}', space=vmem, size = 0x9000, scoped, tag = 'internal scratch']
  #allocation2 [shape = 'f32[8,32]{1,0:T(8,128)}', space=vmem, size = 0x1000, scoped, tag = 'scratch operand']
  #allocation3 [shape = 'f32[8,1]{1,0:T(8,128)}', space=vmem, size = 0x1000, scoped, tag = 'scratch operand']
  #allocation4 [shape = 'f32[8,1]{1,0:T(8,128)}', space=vmem, size = 0x1000, scoped, tag = 'scratch operand']
  #allocation5 [shape = 'f32[8,32]{1,0:T(8,128)}', space=vmem, size = 0x1000, scoped, tag = 'scratch operand']
  %s0 = inlined_call_operand.hbm [shape: f32[6,32], index: 0, kind: input, shape index: {}]
  %s1 = inlined_call_operand.hbm [shape: f32[2,8,32], index: 1, kind: input, shape index: {}]
  %s2 = inlined_call_operand.hbm [shape: f32[2,16,32], index: 2, kind: input, shape index: {}]
  %s3 = inlined_call_operand.hbm [shape: f32[2,16,32], index: 3, kind: input, shape index: {}]
  %s4 = inlined_call_operand.hbm [shape: f32[2,8,32], index: 4, kind: output, shape index: {}]
  %s5 = sld [smem:[#allocation0]]
  $region73: #{tpu_custom_call.1} parent=0
    _
  %s7 = ssub.s32 1, %s5
  %s8 = scalar_select 0, %s7, %s5
  $region1: #{tpu_custom_call.1} parent=0
    #allocation6 [shape = 'u8[4096]{0}', space=vmem, size = 0x1000, scoped, tag = 'input window, operand 0, single buffered']
    #allocation7 [shape = 's32[2]{0}', space=sflag, size = 0x8, scoped, tag = 'scoped memory for tpu_custom_call.1']
    #allocation8 [shape = 's32[2]{0}', space=sflag, size = 0x8, scoped, tag = 'scoped memory for tpu_custom_call.1']
    #allocation9 [shape = 'u8[8192]{0}', space=vmem, size = 0x2000, scoped, tag = 'input window, operand 1']
    #allocation10 [shape = 's32[2]{0}', space=sflag, size = 0x8, scoped, tag = 'scoped memory for tpu_custom_call.1']
    #allocation11 [shape = 'u8[16384]{0}', space=vmem, size = 0x4000, scoped, tag = 'input window, operand 2']
    #allocation12 [shape = 'u8[16384]{0}', space=vmem, size = 0x4000, scoped, tag = 'input window, operand 3']
    #allocation13 [shape = 's32[2]{0}', space=sflag, size = 0x8, scoped, tag = 'scoped memory for tpu_custom_call.1']
    #allocation14 [shape = 'u8[8192]{0}', space=vmem, size = 0x2000, scoped, tag = 'output window, operand 0']
    %9 = vsyncpa [#allocation7], 0
    %10 = vsyncpa [#allocation10], 0
    %s11 = scalar_lea.sflag [#allocation10], 1
    %12 = vsyncpa %s11, 0
    %13 = vsyncpa [#allocation13], 0
    %s14 = scalar_lea.sflag [#allocation13], 1
    %15 = vsyncpa %s14, 0
    %16 = vsyncpa [#allocation8], 0
    %s17 = scalar_lea.sflag [#allocation8], 1
    %18 = vsyncpa %s17, 0
    loop: start=0, step=1, limit=4
    $region2: #{tpu_custom_call.1} parent=1 // loop_pre_header
      _
    $region3: #{tpu_custom_call.1} parent=1 // loop_header
      %s20 = sphi 0, %s24
      %p21 = scmp.ge.s32.totalorder %s20, 4
      %s27 = sphi 0, %s46
      %s28 = sphi 0, %s42
      %s29 = sphi 0, %s38
      %s30 = sphi 0, %s27
      %s31 = sphi 0, %s28
      %s32 = sphi 0, %s29
      %s33 = sphi 0, %s30
      %s34 = sphi 0, %s31
      %s35 = sphi 0, %s32
      %s47 = sphi 0, %s47
      %s49 = sphi 0, %s47
      %s50 = sphi 0, %s49
      %s64 = sphi 0, %s50
      %s72 = sphi 0, %s74
      %s75 = sphi 0, %s72
      %s76 = sphi 0, %s75
      %s92 = sphi 0, %s76
      %s100 = sphi 0, %s102
      %s103 = sphi 0, %s100
      %s104 = sphi 0, %s103
      %s120 = sphi 0, %s104
      %s128 = sphi 0, %s130
      %s131 = sphi 0, %s128
      %s132 = sphi 0, %s131
      %s148 = sphi 0, %s132
      %s156 = sphi 0, %s158
      %s159 = sphi 0, %s156
      %s160 = sphi 0, %s159
      %s176 = sphi 0, %s160
    $region4: #{tpu_custom_call.1} parent=1 // loop_header_branch
      %23 = sbr.rel (%p21) target = $region8
    $region5: #{tpu_custom_call.1} parent=1 // loop_body
      %s25 = ssub.s32 %s20, 1
      %s26 = ssub.s32 %s20, 2
      %s36 = sadd.s32 1, %s29
      %p37 = scmp.ge.s32.totalorder %s36, 1
      %s38 = scalar_select %p37, 0, %s36
      %s39 = sadd.s32 1, %s28
      %s40 = scalar_select %p37, %s39, %s28
      %p41 = scmp.ge.s32.totalorder %s40, 1
      %s42 = scalar_select %p41, 0, %s40
      %s43 = sadd.s32 1, %s27
      %s44 = scalar_select %p41, %s43, %s27
      %p45 = scmp.ge.s32.totalorder %s44, 2
      %s46 = scalar_select %p45, 0, %s44
      %s48 = sadd.s32 %s47, 1
      %p51 = scmp.eq.s32.totalorder %s20, 1
      %p52 = scmp.ne.s32.totalorder %s47, %s49
      %p53 = scmp.eq.s32.totalorder %s20, 0
      %p54 = por %p52, %p53
      %p55 = scmp.ne.s32.totalorder %s47, %s49
      %p56 = scmp.eq.s32.totalorder %s25, 1
      %p57 = por %p55, %p56
      %p58 = scmp.ne.s32.totalorder %s49, %s50
      %p59 = scmp.eq.s32.totalorder %s25, 0
      %p60 = por %p58, %p59
      %p61 = scmp.ne.s32.totalorder %s49, %s50
      %p62 = scmp.eq.s32.totalorder %s26, 1
      %p63 = por %p61, %p62
      %p65 = scmp.ne.s32.totalorder %s50, %s64
      %p66 = scmp.eq.s32.totalorder %s26, 0
      %p67 = por %p65, %p66
      %s68 = ssub.s32 %s27, %s46
      %s69 = ssub.s32 %s28, %s42
      %s70 = sor.u32 %s68, %s69
      %p71 = scmp.eq.s32.totalorder %s70, 0
      %s73 = sadd.s32 %s72, 1
      %s74 = scalar_select %p71, %s72, %s73
      %p77 = pneg %p71
      %p78 = scmp.eq.s32.totalorder %s20, 1
      %p79 = por %p77, %p78
      %p80 = scmp.ne.s32.totalorder %s72, %s75
      %p81 = scmp.eq.s32.totalorder %s20, 0
      %p82 = por %p80, %p81
      %p83 = scmp.ne.s32.totalorder %s72, %s75
      %p84 = scmp.eq.s32.totalorder %s25, 1
      %p85 = por %p83, %p84
      %p86 = scmp.ne.s32.totalorder %s75, %s76
      %p87 = scmp.eq.s32.totalorder %s25, 0
      %p88 = por %p86, %p87
      %p89 = scmp.ne.s32.totalorder %s75, %s76
      %p90 = scmp.eq.s32.totalorder %s26, 1
      %p91 = por %p89, %p90
      %p93 = scmp.ne.s32.totalorder %s76, %s92
      %p94 = scmp.eq.s32.totalorder %s26, 0
      %p95 = por %p93, %p94
      %s96 = ssub.s32 %s27, %s46
      %s97 = ssub.s32 %s29, %s38
      %s98 = sor.u32 %s96, %s97
      %p99 = scmp.eq.s32.totalorder %s98, 0
      %s101 = sadd.s32 %s100, 1
      %s102 = scalar_select %p99, %s100, %s101
      %p105 = pneg %p99
      %p106 = scmp.eq.s32.totalorder %s20, 1
      %p107 = por %p105, %p106
      %p108 = scmp.ne.s32.totalorder %s100, %s103
      %p109 = scmp.eq.s32.totalorder %s20, 0
      %p110 = por %p108, %p109
      %p111 = scmp.ne.s32.totalorder %s100, %s103
      %p112 = scmp.eq.s32.totalorder %s25, 1
      %p113 = por %p111, %p112
      %p114 = scmp.ne.s32.totalorder %s103, %s104
      %p115 = scmp.eq.s32.totalorder %s25, 0
      %p116 = por %p114, %p115
      %p117 = scmp.ne.s32.totalorder %s103, %s104
      %p118 = scmp.eq.s32.totalorder %s26, 1
      %p119 = por %p117, %p118
      %p121 = scmp.ne.s32.totalorder %s104, %s120
      %p122 = scmp.eq.s32.totalorder %s26, 0
      %p123 = por %p121, %p122
      %s124 = ssub.s32 %s27, %s46
      %s125 = ssub.s32 %s29, %s38
      %s126 = sor.u32 %s124, %s125
      %p127 = scmp.eq.s32.totalorder %s126, 0
      %s129 = sadd.s32 %s128, 1
      %s130 = scalar_select %p127, %s128, %s129
      %p133 = pneg %p127
      %p134 = scmp.eq.s32.totalorder %s20, 1
      %p135 = por %p133, %p134
      %p136 = scmp.ne.s32.totalorder %s128, %s131
      %p137 = scmp.eq.s32.totalorder %s20, 0
      %p138 = por %p136, %p137
      %p139 = scmp.ne.s32.totalorder %s128, %s131
      %p140 = scmp.eq.s32.totalorder %s25, 1
      %p141 = por %p139, %p140
      %p142 = scmp.ne.s32.totalorder %s131, %s132
      %p143 = scmp.eq.s32.totalorder %s25, 0
      %p144 = por %p142, %p143
      %p145 = scmp.ne.s32.totalorder %s131, %s132
      %p146 = scmp.eq.s32.totalorder %s26, 1
      %p147 = por %p145, %p146
      %p149 = scmp.ne.s32.totalorder %s132, %s148
      %p150 = scmp.eq.s32.totalorder %s26, 0
      %p151 = por %p149, %p150
      %s152 = ssub.s32 %s27, %s46
      %s153 = ssub.s32 %s28, %s42
      %s154 = sor.u32 %s152, %s153
      %p155 = scmp.eq.s32.totalorder %s154, 0
      %s157 = sadd.s32 %s156, 1
      %s158 = scalar_select %p155, %s156, %s157
      %p161 = pneg %p155
      %p162 = scmp.eq.s32.totalorder %s20, 1
      %p163 = por %p161, %p162
      %p164 = scmp.ne.s32.totalorder %s156, %s159
      %p165 = scmp.eq.s32.totalorder %s20, 0
      %p166 = por %p164, %p165
      %p167 = scmp.ne.s32.totalorder %s156, %s159
      %p168 = scmp.eq.s32.totalorder %s25, 1
      %p169 = por %p167, %p168
      %p170 = scmp.ne.s32.totalorder %s159, %s160
      %p171 = scmp.eq.s32.totalorder %s25, 0
      %p172 = por %p170, %p171
      %p173 = scmp.ne.s32.totalorder %s159, %s160
      %p174 = scmp.eq.s32.totalorder %s26, 1
      %p175 = por %p173, %p174
      %p177 = scmp.ne.s32.totalorder %s160, %s176
      %p178 = scmp.eq.s32.totalorder %s26, 0
      %p179 = por %p177, %p178
      %p180 = scmp.le.s32.totalorder 1, %s20
      %p181 = scmp.lt.s32.totalorder %s20, 3
      %p182 = pnand %p180, %p181
      %p183 = pneg %p182
      // Predicated region
      $region9: #{tpu_custom_call.1} parent=5 // pred_check
        _
      $region10: #{tpu_custom_call.1} parent=5 // pred_check_branch
        %185 = sbr.rel (%p182) target = $region12
      $region11: #{tpu_custom_call.1} parent=5 // pred_region
        %s186 = ssub.s32 %s20, 1
        // Predicated region
        $region13: #{tpu_custom_call.1} parent=11 // pred_check
          %p187 = pneg %p60
        $region14: #{tpu_custom_call.1} parent=11 // pred_check_branch
          %189 = sbr.rel (%p187) target = $region16
        $region15: #{tpu_custom_call.1} parent=11 // pred_region
          %191 = vsyncadd [#allocation7], 0
          %s193 = sshll.u32 %s0, 4
          %s194 = int_to_ptr.hbm [resolvable:$true] %s193
          %s195 = sshll.u32 [#allocation6], 4
          %s196 = int_to_ptr.vmem [resolvable:$true] %s195
          %198 = dma.hbm_to_vmem [thread:$0]  %s194, 128, %s196, [#allocation7]
        $region16: #{tpu_custom_call.1} parent=11 // pred_fallthru
          _
      $region12: #{tpu_custom_call.1} parent=5 // pred_fallthru
        _
      %p199 = scmp.lt.s32.totalorder %s20, 2
      // Predicated region
      $region17: #{tpu_custom_call.1} parent=5 // pred_check
        %p200 = pneg %p199
      $region18: #{tpu_custom_call.1} parent=5 // pred_check_branch
        %202 = sbr.rel (%p200) target = $region20
      $region19: #{tpu_custom_call.1} parent=5 // pred_region
        // Predicated region
        $region21: #{tpu_custom_call.1} parent=19 // pred_check
          %p203 = pneg %p82
        $region22: #{tpu_custom_call.1} parent=19 // pred_check_branch
          %205 = sbr.rel (%p203) target = $region24
        $region23: #{tpu_custom_call.1} parent=19 // pred_region
          %s206 = sand.u32 %s20, 1
          %s207 = scalar_lea.sflag [#allocation10], %s206
          %s208 = sand.u32 %s72, 1
          %s209 = smul.addr %s208, 8
          %s210 = scalar_lea.vmem [#allocation9], %s209
          %212 = vsyncadd %s207, 0
          %s213 = sadd.s32 %s28, %s27
          %s214 = smul.addr %s213, 8
          %s215 = scalar_lea.hbm %s1, %s214
          %s217 = sshll.u32 %s215, 4
          %s218 = int_to_ptr.hbm [resolvable:$true] %s217
          %s219 = sshll.u32 %s210, 4
          %s220 = int_to_ptr.vmem [resolvable:$true] %s219
          %222 = dma.hbm_to_vmem [thread:$0]  %s218, 128, %s220, %s207
        $region24: #{tpu_custom_call.1} parent=19 // pred_fallthru
          _
        // Predicated region
        $region25: #{tpu_custom_call.1} parent=19 // pred_check
          %p223 = pneg %p110
        $region26: #{tpu_custom_call.1} parent=19 // pred_check_branch
          %225 = sbr.rel (%p223) target = $region28
        $region27: #{tpu_custom_call.1} parent=19 // pred_region
          %s226 = sand.u32 %s20, 1
          %s227 = scalar_lea.sflag [#allocation10], %s226
          %s228 = sand.u32 %s100, 1
          %s229 = smul.addr %s228, 16
          %s230 = scalar_lea.vmem [#allocation11], %s229
          %s231 = smul.u32 2, %s29
          %233 = vsyncadd %s227, 0
          %s234 = smul.addr %s27, 2
          %s235 = sadd.s32 %s231, %s234
          %s236 = smul.addr %s235, 8
          %s237 = scalar_lea.hbm %s2, %s236
          %s238 = sshll.u32 %s237, 4
          %s239 = int_to_ptr.hbm [resolvable:$true] %s238
          %s240 = sshll.u32 %s230, 4
          %s241 = int_to_ptr.vmem [resolvable:$true] %s240
          %246 = dma.hbm_to_vmem [thread:$0]  %s239, 256, %s241, %s227, 128, 128, 8
        $region28: #{tpu_custom_call.1} parent=19 // pred_fallthru
          _
        // Predicated region
        $region29: #{tpu_custom_call.1} parent=19 // pred_check
          %p247 = pneg %p138
        $region30: #{tpu_custom_call.1} parent=19 // pred_check_branch
          %249 = sbr.rel (%p247) target = $region32
        $region31: #{tpu_custom_call.1} parent=19 // pred_region
          %s250 = sand.u32 %s128, 1
          %s251 = scalar_lea.sflag [#allocation13], %s250
          %s252 = sand.u32 %s128, 1
          %s253 = smul.addr %s252, 16
          %s254 = scalar_lea.vmem [#allocation12], %s253
          %s255 = smul.u32 2, %s29
          %257 = vsyncadd %s251, 0
          %s258 = smul.addr %s27, 2
          %s259 = sadd.s32 %s255, %s258
          %s260 = smul.addr %s259, 8
          %s261 = scalar_lea.hbm %s3, %s260
          %s262 = sshll.u32 %s261, 4
          %s263 = int_to_ptr.hbm [resolvable:$true] %s262
          %s264 = sshll.u32 %s254, 4
          %s265 = int_to_ptr.vmem [resolvable:$true] %s264
          %270 = dma.hbm_to_vmem [thread:$0]  %s263, 256, %s265, %s251, 128, 128, 8
        $region32: #{tpu_custom_call.1} parent=19 // pred_fallthru
          _
      $region20: #{tpu_custom_call.1} parent=5 // pred_fallthru
        _
      %p271 = scmp.le.s32.totalorder 1, %s20
      %p272 = scmp.lt.s32.totalorder %s20, 3
      %p273 = pnand %p271, %p272
      %p274 = pneg %p273
      // Predicated region
      $region33: #{tpu_custom_call.1} parent=5 // pred_check
        _
      $region34: #{tpu_custom_call.1} parent=5 // pred_check_branch
        %276 = sbr.rel (%p273) target = $region36
      $region35: #{tpu_custom_call.1} parent=5 // pred_region
        %s277 = ssub.s32 %s20, 1
        // Predicated region
        $region37: #{tpu_custom_call.1} parent=35 // pred_check
          %p278 = pneg %p60
        $region38: #{tpu_custom_call.1} parent=35 // pred_check_branch
          %280 = sbr.rel (%p278) target = $region40
        $region39: #{tpu_custom_call.1} parent=35 // pred_region
          %282 = dma.done [#allocation7], 128
        $region40: #{tpu_custom_call.1} parent=35 // pred_fallthru
          _
        %s283 = sand.u32 %s25, 1
        %s284 = scalar_lea.sflag [#allocation10], %s283
        %s285 = sand.u32 %s75, 1
        %s286 = smul.addr %s285, 8
        %s287 = scalar_lea.vmem [#allocation9], %s286
        // Predicated region
        $region41: #{tpu_custom_call.1} parent=35 // pred_check
          %p288 = pneg %p88
        $region42: #{tpu_custom_call.1} parent=35 // pred_check_branch
          %290 = sbr.rel (%p288) target = $region44
        $region43: #{tpu_custom_call.1} parent=35 // pred_region
          %292 = dma.done %s284, 128
        $region44: #{tpu_custom_call.1} parent=35 // pred_fallthru
          _
        %s293 = sand.u32 %s25, 1
        %s294 = scalar_lea.sflag [#allocation10], %s293
        %s295 = sand.u32 %s103, 1
        %s296 = smul.addr %s295, 16
        %s297 = scalar_lea.vmem [#allocation11], %s296
        // Predicated region
        $region45: #{tpu_custom_call.1} parent=35 // pred_check
          %p298 = pneg %p116
        $region46: #{tpu_custom_call.1} parent=35 // pred_check_branch
          %300 = sbr.rel (%p298) target = $region48
        $region47: #{tpu_custom_call.1} parent=35 // pred_region
          %302 = dma.done %s294, 256
        $region48: #{tpu_custom_call.1} parent=35 // pred_fallthru
          _
        %s303 = sand.u32 %s131, 1
        %s304 = scalar_lea.sflag [#allocation13], %s303
        %s305 = sand.u32 %s131, 1
        %s306 = smul.addr %s305, 16
        %s307 = scalar_lea.vmem [#allocation12], %s306
        // Predicated region
        $region49: #{tpu_custom_call.1} parent=35 // pred_check
          %p308 = pneg %p144
        $region50: #{tpu_custom_call.1} parent=35 // pred_check_branch
          %310 = sbr.rel (%p308) target = $region52
        $region51: #{tpu_custom_call.1} parent=35 // pred_region
          %312 = dma.done %s304, 256
        $region52: #{tpu_custom_call.1} parent=35 // pred_fallthru
          _
        %p313 = pneg %p60
        %p314 = pneg %p57
        %s315 = sand.u32 %s25, 1
        %s316 = scalar_lea.sflag [#allocation10], %s315
        %s317 = sand.u32 %s75, 1
        %s318 = smul.addr %s317, 8
        %s319 = scalar_lea.vmem [#allocation9], %s318
        %p320 = pneg %p88
        %p321 = pneg %p85
        %s322 = sand.u32 %s25, 1
        %s323 = scalar_lea.sflag [#allocation10], %s322
        %s324 = sand.u32 %s103, 1
        %s325 = smul.addr %s324, 16
        %s326 = scalar_lea.vmem [#allocation11], %s325
        %p327 = pneg %p116
        %p328 = pneg %p113
        %s329 = sand.u32 %s131, 1
        %s330 = scalar_lea.sflag [#allocation13], %s329
        %s331 = sand.u32 %s131, 1
        %s332 = smul.addr %s331, 16
        %s333 = scalar_lea.vmem [#allocation12], %s332
        %p334 = pneg %p144
        %p335 = pneg %p141
        %p336 = pneg %p172
        %p337 = pneg %p169
        %s338 = sand.u32 %s159, 1
        %s339 = scalar_lea.sflag [#allocation8], %s338
        %s340 = sand.u32 %s159, 1
        %s341 = smul.addr %s340, 8
        %s342 = scalar_lea.vmem [#allocation14], %s341
        %s343 = smul.u32 2, %s32
        %s344 = smul.u32 2, %s32
        %v345 = vld [vmem:[#allocation6] sm:$0x3f]
        %p346 = scmp.eq.s32.totalorder %s32, 0
        // Predicated region
        $region53: #{tpu_custom_call.1} parent=35 // pred_check
          %p347 = pneg %p346
        $region54: #{tpu_custom_call.1} parent=35 // pred_check_branch
          %349 = sbr.rel (%p347) target = $region56
        $region55: #{tpu_custom_call.1} parent=35 // pred_region
          %v350 = vld [vmem:[%s287] sm:$0xff]
          %vm351 = vcmask 261120
          %v352 = vsel %vm351, %v350, 0.0
          %353 = vadd.xlane.f32.xlu0 %v352
          %v354 = vpop.xlane.xlu0 %353
          %v355 = vmul.f32 %v350, %v350
          %v356 = vsel %vm351, %v355, 0.0
          %357 = vadd.xlane.f32.xlu0 %v356
          %v358 = vpop.xlane.xlu0 %357
          %v359 = vmul.f32 %v354, 0.03125
          %v360 = vmul.f32 %v358, 0.03125
          %v361 = vmul.f32 %v359, %v359
          %v362 = vsub.f32 %v360, %v361
          %v363 = vmax.f32 %v362, 0.0
          %v364 = vsub.f32 %v350, %v359
          %v365 = vadd.f32 %v363, 1e-05
          %v366 = vrsqrt.pop %v365
          %v367 = vmul.f32 %v366, %v365
          %v368 = vmul.f32 %v367, %v366
          %v369 = vmul.f32 0.5, %v368
          %v370 = vsub.f32 1.5, %v369
          %v371 = vmul.f32 %v366, %v370
          %vm372 = vweird.f32 %v365
          %vm373 = vweird.f32 %v366
          %vm374 = vmor %vm372, %vm373
          %v375 = vsel %vm374, %v366, %v371
          %v376 = vmul.f32 %v364, %v375
          %v377 = vperm.slane %v345, 0
          %v378 = vmul.f32 %v376, %v377
          %v379 = vperm.slane %v345, 1
          %v380 = vadd.f32 %v378, %v379
          %v381 = vmul.f32 %v380, 0.17677669
          %382 = vst.msk [vmem:[#allocation2] sm:$0xff] %vm351, %v381
          %vm383 = vcmask 7168
          %384 = vst.msk [vmem:[#allocation3] sm:$0xff] %vm383, -inf
          %385 = vst.msk [vmem:[#allocation4] sm:$0xff] %vm383, 0.0
          %386 = vst.msk [vmem:[#allocation5] sm:$0xff] %vm351, 0.0
        $region56: #{tpu_custom_call.1} parent=35 // pred_fallthru
          _
        %v387 = vld [vmem:[%s297] sm:$0xff]
        %v388 = vld [vmem:[%s297 + $0x8] sm:$0xff]
        %vm389 = vcmask 261120
        %v390 = vsel %vm389, %v387, 0.0
        %391 = vadd.xlane.f32.xlu0 %v390
        %v392 = vpop.xlane.xlu0 %391
        %v393 = vsel %vm389, %v388, 0.0
        %394 = vadd.xlane.f32.xlu0 %v393
        %v395 = vpop.xlane.xlu0 %394
        %v396 = vmul.f32 %v387, %v387
        %v397 = vmul.f32 %v388, %v388
        %v398 = vsel %vm389, %v396, 0.0
        %399 = vadd.xlane.f32.xlu0 %v398
        %v400 = vpop.xlane.xlu0 %399
        %v401 = vsel %vm389, %v397, 0.0
        %402 = vadd.xlane.f32.xlu0 %v401
        %v403 = vpop.xlane.xlu0 %402
        %v404 = vmul.f32 %v392, 0.03125
        %v405 = vmul.f32 %v395, 0.03125
        %v406 = vmul.f32 %v400, 0.03125
        %v407 = vmul.f32 %v403, 0.03125
        %v408 = vmul.f32 %v404, %v404
        %v409 = vmul.f32 %v405, %v405
        %v410 = vsub.f32 %v406, %v408
        %v411 = vsub.f32 %v407, %v409
        %v412 = vmax.f32 %v410, 0.0
        %v413 = vmax.f32 %v411, 0.0
        %v414 = vsub.f32 %v387, %v404
        %v415 = vsub.f32 %v388, %v405
        %v416 = vadd.f32 %v412, 1e-05
        %v417 = vadd.f32 %v413, 1e-05
        %v418 = vrsqrt.pop %v416
        %v419 = vmul.f32 %v418, %v416
        %v420 = vmul.f32 %v419, %v418
        %v421 = vmul.f32 0.5, %v420
        %v422 = vsub.f32 1.5, %v421
        %v423 = vmul.f32 %v418, %v422
        %vm424 = vweird.f32 %v416
        %vm425 = vweird.f32 %v418
        %vm426 = vmor %vm424, %vm425
        %v427 = vsel %vm426, %v418, %v423
        %v428 = vrsqrt.pop %v417
        %v429 = vmul.f32 %v428, %v417
        %v430 = vmul.f32 %v429, %v428
        %v431 = vmul.f32 0.5, %v430
        %v432 = vsub.f32 1.5, %v431
        %v433 = vmul.f32 %v428, %v432
        %vm434 = vweird.f32 %v417
        %vm435 = vweird.f32 %v428
        %vm436 = vmor %vm434, %vm435
        %v437 = vsel %vm436, %v428, %v433
        %v438 = vmul.f32 %v414, %v427
        %v439 = vmul.f32 %v415, %v437
        %v440 = vperm.slane %v345, 2
        %v441 = vmul.f32 %v438, %v440
        %v442 = vmul.f32 %v439, %v440
        %v443 = vperm.slane %v345, 3
        %v444 = vadd.f32 %v441, %v443
        %v445 = vadd.f32 %v442, %v443
        %v446 = vld [vmem:[%s307] sm:$0xff]
        %v447 = vld [vmem:[%s307 + $0x8] sm:$0xff]
        %v448 = vsel %vm389, %v446, 0.0
        %449 = vadd.xlane.f32.xlu0 %v448
        %v450 = vpop.xlane.xlu0 %449
        %v451 = vsel %vm389, %v447, 0.0
        %452 = vadd.xlane.f32.xlu0 %v451
        %v453 = vpop.xlane.xlu0 %452
        %v454 = vmul.f32 %v446, %v446
        %v455 = vmul.f32 %v447, %v447
        %v456 = vsel %vm389, %v454, 0.0
        %457 = vadd.xlane.f32.xlu0 %v456
        %v458 = vpop.xlane.xlu0 %457
        %v459 = vsel %vm389, %v455, 0.0
        %460 = vadd.xlane.f32.xlu0 %v459
        %v461 = vpop.xlane.xlu0 %460
        %v462 = vmul.f32 %v450, 0.03125
        %v463 = vmul.f32 %v453, 0.03125
        %v464 = vmul.f32 %v458, 0.03125
        %v465 = vmul.f32 %v461, 0.03125
        %v466 = vmul.f32 %v462, %v462
        %v467 = vmul.f32 %v463, %v463
        %v468 = vsub.f32 %v464, %v466
        %v469 = vsub.f32 %v465, %v467
        %v470 = vmax.f32 %v468, 0.0
        %v471 = vmax.f32 %v469, 0.0
        %v472 = vsub.f32 %v446, %v462
        %v473 = vsub.f32 %v447, %v463
        %v474 = vadd.f32 %v470, 1e-05
        %v475 = vadd.f32 %v471, 1e-05
        %v476 = vrsqrt.pop %v474
        %v477 = vmul.f32 %v476, %v474
        %v478 = vmul.f32 %v477, %v476
        %v479 = vmul.f32 0.5, %v478
        %v480 = vsub.f32 1.5, %v479
        %v481 = vmul.f32 %v476, %v480
        %vm482 = vweird.f32 %v474
        %vm483 = vweird.f32 %v476
        %vm484 = vmor %vm482, %vm483
        %v485 = vsel %vm484, %v476, %v481
        %v486 = vrsqrt.pop %v475
        %v487 = vmul.f32 %v486, %v475
        %v488 = vmul.f32 %v487, %v486
        %v489 = vmul.f32 0.5, %v488
        %v490 = vsub.f32 1.5, %v489
        %v491 = vmul.f32 %v486, %v490
        %vm492 = vweird.f32 %v475
        %vm493 = vweird.f32 %v486
        %vm494 = vmor %vm492, %vm493
        %v495 = vsel %vm494, %v486, %v491
        %v496 = vmul.f32 %v472, %v485
        %v497 = vmul.f32 %v473, %v495
        %v498 = vperm.slane %v345, 4
        %v499 = vmul.f32 %v496, %v498
        %v500 = vmul.f32 %v497, %v498
        %v501 = vperm.slane %v345, 5
        %v502 = vadd.f32 %v499, %v501
        %v503 = vadd.f32 %v500, %v501
        %v504 = vld [vmem:[#allocation2] sm:$0xff]
        %v506 = vsel %vm389, %v504, 0
        %v509 = vsel %vm389, %v444, 0
        %v512 = vsel %vm389, %v445, 0
        %514 = vmatpush.xpose.msra.mxu0 0.0
        %515 = vmatpush.xpose.msra.mxu0 0.0
        %516 = vmatpush.xpose.msra.mxu0 0.0
        %517 = vmatpush.xpose.msra.mxu0 0.0
        %518 = vmatpush.xpose.msra.mxu0 0.0
        %519 = vmatpush.xpose.msra.mxu0 0.0
        %520 = vmatpush.xpose.msra.mxu0 0.0
        %521 = vmatpush.xpose.msra.mxu0 0.0
        %522 = vmatpush.xpose.msra.mxu0 0.0
        %523 = vmatpush.xpose.msra.mxu0 0.0
        %524 = vmatpush.xpose.msra.mxu0 0.0
        %525 = vmatpush.xpose.msra.mxu0 0.0
        %526 = vmatpush.xpose.msra.mxu0 0.0
        %527 = vmatpush.xpose.msra.mxu0 0.0
        %528 = vmatpush.xpose.msra.mxu0 %v512
        %529 = vmatpush.xpose.msra.mxu0 %v509
        %530 = vmatmul.f32.gmra.mxu0 %v506
        %v531 = vpop.f32.mrf.mxu0
        %v532 = vadd.f32 0.0, %v531
        %533 = vdwg.mxu0
        %v534 = vld [vmem:[#allocation3] sm:$0xff]
        %vm535 = vcmask 130048
        %v536 = vsel %vm535, %v532, -inf
        %537 = vmax.xlane.f32.xlu0 %v536
        %v538 = vpop.xlane.xlu0 %537
        %v539 = vmax.f32 %v534, %v538
        %v540 = vsub.f32 %v534, %v539
        %v541 = vmul.f32 %v540, 1.442695
        %v542 = vpow.pop %v541
        %544 = vset.pattern.permute.xlu0 0
        %545 = vperm.xlu0 %544, %v539
        %v546 = vpop.permute.xlu0 %545
        %v548 = vsub.f32 %v532, %v546
        %v549 = vmul.f32 %v548, 1.442695
        %v550 = vpow.pop %v549
        %v551 = vld [vmem:[#allocation4] sm:$0xff]
        %v552 = vmul.f32 %v542, %v551
        %v553 = vsel %vm535, %v550, 0.0
        %554 = vadd.xlane.f32.xlu0 %v553
        %v555 = vpop.xlane.xlu0 %554
        %v556 = vadd.f32 %v552, %v555
        %vm557 = vcmask 7168
        %558 = vst.msk [vmem:[#allocation4] sm:$0xff] %vm557, %v556
        %v559 = vld [vmem:[#allocation5] sm:$0xff]
        %561 = vset.pattern.permute.xlu0 0
        %562 = vperm.xlu0 %561, %v542
        %v563 = vpop.permute.xlu0 %562
        %v565 = vmul.f32 %v563, %v559
        %v567 = vsel %vm535, %v550, 0
        %569 = vmatpush.msra.mxu0 0.0
        %570 = vmatpush.msra.mxu0 0.0
        %571 = vmatpush.msra.mxu0 0.0
        %572 = vmatpush.msra.mxu0 0.0
        %573 = vmatpush.msra.mxu0 0.0
        %574 = vmatpush.msra.mxu0 0.0
        %575 = vmatpush.msra.mxu0 0.0
        %576 = vmatpush.msra.mxu0 0.0
        %577 = vmatpush.msra.mxu0 0.0
        %578 = vmatpush.msra.mxu0 0.0
        %579 = vmatpush.msra.mxu0 0.0
        %580 = vmatpush.msra.mxu0 0.0
        %581 = vmatpush.msra.mxu0 0.0
        %582 = vmatpush.msra.mxu0 0.0
        %583 = vmatpush.msra.mxu0 %v503
        %584 = vmatpush.msra.mxu0 %v502
        %585 = vmatmul.f32.gmra.mxu0 %v567
        %v586 = vpop.f32.mrf.mxu0
        %v587 = vadd.f32 0.0, %v586
        %588 = vdwg.mxu0
        %v589 = vadd.f32 %v565, %v587
        %590 = vst.msk [vmem:[#allocation5] sm:$0xff] %vm389, %v589
        %591 = vst.msk [vmem:[#allocation3] sm:$0xff] %vm557, %v539
        // Predicated region
        $region57: #{tpu_custom_call.1} parent=35 // pred_check
          %p592 = pneg %p346
        $region58: #{tpu_custom_call.1} parent=35 // pred_check_branch
          %594 = sbr.rel (%p592) target = $region60
        $region59: #{tpu_custom_call.1} parent=35 // pred_region
          %v595 = vld [vmem:[#allocation5] sm:$0xff]
          %v596 = vld [vmem:[#allocation4] sm:$0xff]
          %v597 = vrcp.pop %v596
          %599 = vset.pattern.permute.xlu0 0
          %600 = vperm.xlu0 %599, %v597
          %v601 = vpop.permute.xlu0 %600
          %v603 = vmul.f32 %v595, %v601
          %604 = vst.msk [vmem:[%s342] sm:$0xff] %vm389, %v603
        $region60: #{tpu_custom_call.1} parent=35 // pred_fallthru
          _
        %s605 = sand.u32 %s159, 1
        %s606 = scalar_lea.sflag [#allocation8], %s605
        %s607 = sand.u32 %s159, 1
        %s608 = smul.addr %s607, 8
        %s609 = scalar_lea.vmem [#allocation14], %s608
        // Predicated region
        $region61: #{tpu_custom_call.1} parent=35 // pred_check
          %p610 = pneg %p169
        $region62: #{tpu_custom_call.1} parent=35 // pred_check_branch
          %612 = sbr.rel (%p610) target = $region64
        $region63: #{tpu_custom_call.1} parent=35 // pred_region
          %614 = vsyncadd %s606, 0
          %s615 = sadd.s32 %s31, %s30
          %s616 = smul.addr %s615, 8
          %s617 = scalar_lea.hbm %s4, %s616
          %s619 = sshll.u32 %s609, 4
          %s620 = int_to_ptr.vmem [resolvable:$true] %s619
          %s621 = sshll.u32 %s617, 4
          %s622 = int_to_ptr.hbm [resolvable:$true] %s621
          %624 = dma.vmem_to_hbm [thread:$0]  %s620, 128, %s622, %s606
        $region64: #{tpu_custom_call.1} parent=35 // pred_fallthru
          _
      $region36: #{tpu_custom_call.1} parent=5 // pred_fallthru
        _
      %p625 = scmp.le.s32.totalorder 2, %s20
      // Predicated region
      $region65: #{tpu_custom_call.1} parent=5 // pred_check
        %p626 = pneg %p625
      $region66: #{tpu_custom_call.1} parent=5 // pred_check_branch
        %628 = sbr.rel (%p626) target = $region68
      $region67: #{tpu_custom_call.1} parent=5 // pred_region
        %s629 = ssub.s32 %s20, 2
        // Predicated region
        $region69: #{tpu_custom_call.1} parent=67 // pred_check
          %p630 = pneg %p175
        $region70: #{tpu_custom_call.1} parent=67 // pred_check_branch
          %632 = sbr.rel (%p630) target = $region72
        $region71: #{tpu_custom_call.1} parent=67 // pred_region
          %s633 = sand.u32 %s160, 1
          %s634 = scalar_lea.sflag [#allocation8], %s633
          %s635 = sand.u32 %s160, 1
          %s636 = smul.addr %s635, 8
          %s637 = scalar_lea.vmem [#allocation14], %s636
          %639 = dma.done %s634, 128
        $region72: #{tpu_custom_call.1} parent=67 // pred_fallthru
          _
      $region68: #{tpu_custom_call.1} parent=5 // pred_fallthru
        _
    $region6: #{tpu_custom_call.1} parent=1 // loop_footer
      %s24 = sadd.s32 1, %s20
    $region7: #{tpu_custom_call.1} parent=1 // loop_footer_branch
      %19 = sbr.rel target = $region3
    $region8: #{tpu_custom_call.1} parent=1 // loop_exit
      _
    %640 = vsyncpa [#allocation7], 1
    %s641 = scalar_lea.sflag [#allocation7], 1
    %642 = vsyncpa %s641, 1
    %643 = vsyncpa [#allocation10], 1
    %s644 = scalar_lea.sflag [#allocation10], 1
    %645 = vsyncpa %s644, 1
    %646 = vsyncpa [#allocation13], 1
    %s647 = scalar_lea.sflag [#allocation13], 1
    %648 = vsyncpa %s647, 1
    %649 = vsyncpa [#allocation8], 1
    %s650 = scalar_lea.sflag [#allocation8], 1
    %651 = vsyncpa %s650, 1

</llo_original>
